<compile_context>
chip_gen: v6e
topology: v6e:2x2x1
jax: 0.10.0
libtpu: 0.0.40
codegen_flags: <defaults>
</compile_context>

<pallas_src>
import functools

import jax
import jax.numpy as jnp
from jax import lax
from jax.experimental import pallas as pl
from jax.experimental.pallas import tpu as pltpu


def maskd_kernel(tok_ref, ys_ref, yt_ref, out_ref, a_acc, m_acc,
                 *, hw_total, block_hw, mask_cols):
    # tok_ref: (T, C)         feature dtype (bf16 or f32)
    # ys_ref/yt_ref: (1, C, THW) feature dtype
    # out_ref: (1, 1, 128)    f32, per-n partial result (lane-dense store)
    # a_acc/m_acc: (T, 1)     f32 VMEM accumulators across HW tiles
    hw_idx = pl.program_id(1)

    @pl.when(hw_idx == 0)
    def _():
        a_acc[...] = jnp.zeros_like(a_acc)
        m_acc[...] = jnp.zeros_like(m_acc)

    yt = yt_ref[0]                                   # (C, THW)
    ys = ys_ref[0]                                   # (C, THW)

    # Attention logits: MXU matmul (bf16-in/f32-acc when inputs are bf16).
    logits = jnp.dot(tok_ref[...], yt, preferred_element_type=jnp.float32)
    attn = jax.nn.sigmoid(logits)                    # (T, THW) f32

    # Channel-summed squared difference, f32 on the VPU.
    diff = ys.astype(jnp.float32) - yt.astype(jnp.float32)
    dsum = jnp.sum(diff * diff, axis=0, keepdims=True)   # (1, THW)

    if mask_cols:
        # Last HW tile may run past the array edge: zero the padded lanes so
        # they contribute to neither the attention sums nor the squared diff.
        col = hw_idx * block_hw + lax.broadcasted_iota(
            jnp.int32, (1, block_hw), 1)
        valid = col < hw_total
        attn = jnp.where(valid, attn, 0.0)
        dsum = jnp.where(valid, dsum, 0.0)

    a2 = attn * attn
    a_acc[...] += jnp.sum(a2 * dsum, axis=-1, keepdims=True)   # (T, 1)
    m_acc[...] += jnp.sum(attn, axis=-1, keepdims=True)        # (T, 1)

    @pl.when(hw_idx == pl.num_programs(1) - 1)
    def _():
        # Exact divide over T values (do NOT use approx reciprocal here).
        contrib = jnp.sum(a_acc[...] / (m_acc[...] + 1e-5))
        out_ref[...] = jnp.full(out_ref.shape, contrib, dtype=out_ref.dtype)


def _pick_block_hw(hw, c, itemsize, requested=None, input_budget_bytes=20 << 20):
    """Lane-tile width: multiple of 128, sized so 2 inputs x 2 pipeline buffers
    of (C x THW) stay well inside the smallest (v7x) scoped-VMEM budget."""
    if requested is None:
        cap = input_budget_bytes // (4 * c * itemsize)
        requested = int(min(2048, max(128, cap)))
    if requested >= hw:
        return hw, False                       # single full-width tile
    thw = max(128, (requested // 128) * 128)   # lane-aligned
    if thw >= hw:
        return hw, False
    return thw, (hw % thw != 0)


def maskd_loss(y_s, y_t, mask_token, *, block_hw=None):
    """y_s, y_t: (N, C, H, W) bf16/f32; mask_token: (T, C)."""
    N, C, H, W = y_s.shape
    HW = H * W
    T = mask_token.shape[0]
    feat_dtype = y_s.dtype

    ys = y_s.reshape(N, C, HW)                 # keep input dtype (bf16 stays bf16)
    yt = y_t.reshape(N, C, HW)
    tok = mask_token.astype(feat_dtype)        # match feature dtype for the MXU

    itemsize = jnp.dtype(feat_dtype).itemsize
    thw, need_mask = _pick_block_hw(HW, C, itemsize, block_hw)
    num_hw = (HW + thw - 1) // thw

    kernel = functools.partial(
        maskd_kernel, hw_total=HW, block_hw=thw, mask_cols=need_mask)

    # Explicit scoped-VMEM limit (v5e default is only 16 MiB); generous but
    # capped at the v7x-safe 32 MiB.
    vmem_limit = int(min(32 << 20,
                         max(16 << 20, 8 * C * thw * itemsize + (2 << 20))))

    out = pl.pallas_call(
        kernel,
        out_shape=jax.ShapeDtypeStruct((N, 1, 128), jnp.float32),
        grid_spec=pltpu.PrefetchScalarGridSpec(
            num_scalar_prefetch=0,
            grid=(N, num_hw),
            in_specs=[
                pl.BlockSpec((T, C), lambda n, hw: (0, 0)),         # mask_token
                pl.BlockSpec((1, C, thw), lambda n, hw: (n, 0, hw)),  # y_s tile
                pl.BlockSpec((1, C, thw), lambda n, hw: (n, 0, hw)),  # y_t tile
            ],
            out_specs=pl.BlockSpec((1, 1, 128), lambda n, hw: (n, 0, 0)),
            scratch_shapes=[
                pltpu.VMEM((T, 1), jnp.float32),   # a_acc
                pltpu.VMEM((T, 1), jnp.float32),   # m_acc
            ],
        ),
        compiler_params=pltpu.CompilerParams(
            dimension_semantics=("parallel", "arbitrary"),  # N shardable (v7x),
            vmem_limit_bytes=vmem_limit,                    # HW is the reduction
        ),
    )(tok, ys, yt)

    # square_loss.mean() over (N, T, C), then * 0.5
    total = jnp.sum(out[:, 0, 0])
    return 0.5 * total / (N * T * C)


def maskd_loss_ref(y_s, y_t, mask_token):
    """Pure-JAX reference mirroring the PyTorch forward exactly."""
    N, C, H, W = y_s.shape
    k = y_t.reshape(N, C, H * W)
    attn = jax.nn.sigmoid(jnp.einsum("tc,nch->nth", mask_token, k))
    mask = attn.reshape(N, -1, H, W)
    masked_y_s = y_s[:, None] * mask[:, :, None]
    masked_y_t = y_t[:, None] * mask[:, :, None]
    sq = (masked_y_s - masked_y_t) ** 2
    sq = sq.sum((3, 4))
    sq = sq / (mask.sum((2, 3))[..., None] + 1e-5)
    return 0.5 * sq.mean()


if __name__ == "__main__":
    key = jax.random.PRNGKey(0)
    k1, k2, k3 = jax.random.split(key, 3)

    # HW = 324 (not a multiple of 128) + block_hw=128 exercises the tiled
    # accumulation path and the ragged-lane masking.
    N, C, H, W = 2, 32, 18, 18
    T = 8  # num_tokens

    y_s = jax.random.normal(k1, (N, C, H, W), dtype=jnp.float32)
    y_t = jax.random.normal(k2, (N, C, H, W), dtype=jnp.float32)
    # TODO(synk): original module loads mask_token from a pretrained checkpoint;
    # use the module's synthetic N(0, 0.01) init here instead.
    mask_token = 0.01 * jax.random.normal(k3, (T, C), dtype=jnp.float32)

    # f32 path (exact comparison against the reference).
    loss = jax.block_until_ready(maskd_loss(y_s, y_t, mask_token, block_hw=128))
    ref = jax.block_until_ready(maskd_loss_ref(y_s, y_t, mask_token))
    assert jnp.allclose(loss, ref, rtol=1e-4, atol=1e-6), (loss, ref)

    # bf16 I/O path (half the HBM traffic; f32 accumulation inside the kernel).
    ys_bf = y_s.astype(jnp.bfloat16)
    yt_bf = y_t.astype(jnp.bfloat16)
    loss_bf = jax.block_until_ready(
        maskd_loss(ys_bf, yt_bf, mask_token, block_hw=128))
    ref_bf = jax.block_until_ready(
        maskd_loss_ref(ys_bf.astype(jnp.float32), yt_bf.astype(jnp.float32),
                       mask_token.astype(jnp.bfloat16).astype(jnp.float32)))
    assert jnp.allclose(loss_bf, ref_bf, rtol=5e-3, atol=1e-5), (loss_bf, ref_bf)

    print("KERNEL_OK")
</pallas_src>

<mosaic_0001>
module attributes {stable_mosaic.version = 11 : i64} {
  func.func @maskd_kernel(%arg0: i32, %arg1: i32, %arg2: memref<8x32xf32, #tpu.memory_space<vmem>>, %arg3: memref<1x32x128xf32, #tpu.memory_space<vmem>>, %arg4: memref<1x32x128xf32, #tpu.memory_space<vmem>>, %arg5: memref<1x1x128xf32, #tpu.memory_space<vmem>>, %arg6: memref<8x1xf32, #tpu.memory_space<vmem>>, %arg7: memref<8x1xf32, #tpu.memory_space<vmem>>) attributes {dimension_semantics = [#tpu.dimension_semantics<parallel>, #tpu.dimension_semantics<arbitrary>], iteration_bounds = array<i64: 2, 3>, scalar_prefetch = 0 : i64, scratch_operands = 2 : i64, tpu.core_type = #tpu.core_type<tc>, window_params = [{pipeline_mode = #tpu.pipeline_mode<synchronous>, transform_indices = @transform_0, window_bounds = array<i64: 8, 32>}, {transform_indices = @transform_1, window_bounds = array<i64: 1, 32, 128>}, {transform_indices = @transform_2, window_bounds = array<i64: 1, 32, 128>}, {transform_indices = @transform_3, window_bounds = array<i64: 1, 1, 128>}]} {
    %c0_i32 = arith.constant 0 : i32
    %0 = arith.cmpi eq, %arg1, %c0_i32 : i32
    %1 = arith.extui %0 : i1 to i32
    %c0_i32_0 = arith.constant 0 : i32
    %2 = arith.cmpi ne, %1, %c0_i32_0 : i32
    scf.if %2 {
      %cst_23 = arith.constant 0.000000e+00 : f32
      %46 = vector.broadcast %cst_23 : f32 to vector<8x1xf32>
      %c0_24 = arith.constant 0 : index
      %c0_25 = arith.constant 0 : index
      %47 = vector.load %arg6[%c0_24, %c0_25] : memref<8x1xf32, #tpu.memory_space<vmem>>, vector<8x1xf32>
      tpu.vector_store %arg6[%c0_24, %c0_25], %46 {strides = array<i32>} : memref<8x1xf32, #tpu.memory_space<vmem>>, vector<8x1xf32>,
      %cst_26 = arith.constant 0.000000e+00 : f32
      %48 = vector.broadcast %cst_26 : f32 to vector<8x1xf32>
      %c0_27 = arith.constant 0 : index
      %c0_28 = arith.constant 0 : index
      %49 = vector.load %arg7[%c0_27, %c0_28] : memref<8x1xf32, #tpu.memory_space<vmem>>, vector<8x1xf32>
      tpu.vector_store %arg7[%c0_27, %c0_28], %48 {strides = array<i32>} : memref<8x1xf32, #tpu.memory_space<vmem>>, vector<8x1xf32>,
    } else {
    }
    %c0 = arith.constant 0 : index
    %c0_1 = arith.constant 0 : index
    %c0_2 = arith.constant 0 : index
    %3 = vector.load %arg4[%c0, %c0_1, %c0_2] : memref<1x32x128xf32, #tpu.memory_space<vmem>>, vector<1x32x128xf32>
    %4 = vector.shape_cast %3 : vector<1x32x128xf32> to vector<32x128xf32>
    %c0_3 = arith.constant 0 : index
    %c0_4 = arith.constant 0 : index
    %c0_5 = arith.constant 0 : index
    %5 = vector.load %arg3[%c0_3, %c0_4, %c0_5] : memref<1x32x128xf32, #tpu.memory_space<vmem>>, vector<1x32x128xf32>
    %6 = vector.shape_cast %5 : vector<1x32x128xf32> to vector<32x128xf32>
    %c0_6 = arith.constant 0 : index
    %c0_7 = arith.constant 0 : index
    %7 = vector.load %arg2[%c0_6, %c0_7] : memref<8x32xf32, #tpu.memory_space<vmem>>, vector<8x32xf32>
    %cst = arith.constant dense<0.000000e+00> : vector<8x128xf32>
    %8 = tpu.matmul %7, %4, %cst {dimension_numbers = #tpu.dot_dimension_numbers<[1], [0], [0], [1], [0, 0, 1, 1], [], []>} : vector<8x32xf32>, vector<32x128xf32>, vector<8x128xf32> -> vector<8x128xf32>
    %9 = arith.negf %8 : vector<8x128xf32>
    %10 = math.exp %9 : vector<8x128xf32>
    %cst_8 = arith.constant 1.000000e+00 : f32
    %11 = vector.broadcast %cst_8 : f32 to vector<8x128xf32>
    %12 = arith.addf %11, %10 : vector<8x128xf32>
    %13 = arith.divf %11, %12 : vector<8x128xf32>
    %14 = arith.subf %6, %4 : vector<32x128xf32>
    %15 = arith.mulf %14, %14 : vector<32x128xf32>
    %cst_9 = arith.constant dense<0.000000e+00> : vector<128xf32>
    %16 = vector.multi_reduction <add>, %15, %cst_9 [0] : vector<32x128xf32> to vector<128xf32>
    %17 = vector.shape_cast %16 : vector<128xf32> to vector<1x128xf32>
    %c128_i32 = arith.constant 128 : i32
    %18 = arith.muli %arg1, %c128_i32 : i32
    %19 = tpu.iota {dimensions = array<i32: 1>} : vector<1x128xi32>
    %20 = vector.broadcast %18 : i32 to vector<1x128xi32>
    %21 = arith.addi %20, %19 : vector<1x128xi32>
    %c324_i32 = arith.constant 324 : i32
    %22 = vector.broadcast %c324_i32 : i32 to vector<1x128xi32>
    %23 = arith.cmpi slt, %21, %22 : vector<1x128xi32>
    %cst_10 = arith.constant 0.000000e+00 : f32
    %24 = vector.shape_cast %23 : vector<1x128xi1> to vector<1x128xi1>
    %25 = vector.broadcast %24 : vector<1x128xi1> to vector<8x128xi1>
    %26 = vector.broadcast %cst_10 : f32 to vector<8x128xf32>
    %27 = arith.select %25, %13, %26 : vector<8x128xi1>, vector<8x128xf32>
    %cst_11 = arith.constant 0.000000e+00 : f32
    %28 = vector.broadcast %cst_11 : f32 to vector<1x128xf32>
    %29 = arith.select %23, %17, %28 : vector<1x128xi1>, vector<1x128xf32>
    %30 = arith.mulf %27, %27 : vector<8x128xf32>
    %c0_12 = arith.constant 0 : index
    %c0_13 = arith.constant 0 : index
    %31 = vector.load %arg6[%c0_12, %c0_13] : memref<8x1xf32, #tpu.memory_space<vmem>>, vector<8x1xf32>
    %32 = vector.broadcast %29 : vector<1x128xf32> to vector<8x128xf32>
    %33 = arith.mulf %30, %32 : vector<8x128xf32>
    %cst_14 = arith.constant dense<0.000000e+00> : vector<8xf32>
    %34 = vector.multi_reduction <add>, %33, %cst_14 [1] : vector<8x128xf32> to vector<8xf32>
    %35 = vector.shape_cast %34 : vector<8xf32> to vector<8x1xf32>
    %36 = arith.addf %31, %35 : vector<8x1xf32>
    %c0_15 = arith.constant 0 : index
    %c0_16 = arith.constant 0 : index
    %37 = vector.load %arg6[%c0_15, %c0_16] : memref<8x1xf32, #tpu.memory_space<vmem>>, vector<8x1xf32>
    tpu.vector_store %arg6[%c0_15, %c0_16], %36 {strides = array<i32>} : memref<8x1xf32, #tpu.memory_space<vmem>>, vector<8x1xf32>,
    %c0_17 = arith.constant 0 : index
    %c0_18 = arith.constant 0 : index
    %38 = vector.load %arg7[%c0_17, %c0_18] : memref<8x1xf32, #tpu.memory_space<vmem>>, vector<8x1xf32>
    %cst_19 = arith.constant dense<0.000000e+00> : vector<8xf32>
    %39 = vector.multi_reduction <add>, %27, %cst_19 [1] : vector<8x128xf32> to vector<8xf32>
    %40 = vector.shape_cast %39 : vector<8xf32> to vector<8x1xf32>
    %41 = arith.addf %38, %40 : vector<8x1xf32>
    %c0_20 = arith.constant 0 : index
    %c0_21 = arith.constant 0 : index
    %42 = vector.load %arg7[%c0_20, %c0_21] : memref<8x1xf32, #tpu.memory_space<vmem>>, vector<8x1xf32>
    tpu.vector_store %arg7[%c0_20, %c0_21], %41 {strides = array<i32>} : memref<8x1xf32, #tpu.memory_space<vmem>>, vector<8x1xf32>,
    %c2_i32 = arith.constant 2 : i32
    %43 = arith.cmpi eq, %arg1, %c2_i32 : i32
    %44 = arith.extui %43 : i1 to i32
    %c0_i32_22 = arith.constant 0 : i32
    %45 = arith.cmpi ne, %44, %c0_i32_22 : i32
    scf.if %45 {
      %c0_23 = arith.constant 0 : index
      %c0_24 = arith.constant 0 : index
      %46 = vector.load %arg6[%c0_23, %c0_24] : memref<8x1xf32, #tpu.memory_space<vmem>>, vector<8x1xf32>
      %c0_25 = arith.constant 0 : index
      %c0_26 = arith.constant 0 : index
      %47 = vector.load %arg7[%c0_25, %c0_26] : memref<8x1xf32, #tpu.memory_space<vmem>>, vector<8x1xf32>
      %cst_27 = arith.constant 9.99999974E-6 : f32
      %48 = vector.broadcast %cst_27 : f32 to vector<8x1xf32>
      %49 = arith.addf %47, %48 : vector<8x1xf32>
      %50 = arith.divf %46, %49 : vector<8x1xf32>
      %51 = vector.shape_cast %50 : vector<8x1xf32> to vector<1x8x1xf32>
      %cst_28 = arith.constant dense<0.000000e+00> : vector<1xf32>
      %52 = vector.multi_reduction <add>, %51, %cst_28 [1, 2] : vector<1x8x1xf32> to vector<1xf32>
      %53 = vector.shape_cast %52 : vector<1xf32> to vector<1x1x1xf32>
      %54 = vector.extract %53[0, 0, 0] : f32 from vector<1x1x1xf32>
      %55 = vector.broadcast %54 : f32 to vector<1x1x128xf32>
      %c0_29 = arith.constant 0 : index
      %c0_30 = arith.constant 0 : index
      %c0_31 = arith.constant 0 : index
      %56 = vector.load %arg5[%c0_29, %c0_30, %c0_31] : memref<1x1x128xf32, #tpu.memory_space<vmem>>, vector<1x1x128xf32>
      tpu.vector_store %arg5[%c0_29, %c0_30, %c0_31], %55 {strides = array<i32>} : memref<1x1x128xf32, #tpu.memory_space<vmem>>, vector<1x1x128xf32>,
    } else {
    }
    return
  }
  func.func @transform_0(%arg0: i32, %arg1: i32) -> (i32, i32) {
    %c0_i32 = arith.constant 0 : i32
    %c0_i32_0 = arith.constant 0 : i32
    %c0_i32_1 = arith.constant 0 : i32
    return %c0_i32, %c0_i32_0 : i32, i32
  }
  func.func @transform_1(%arg0: i32, %arg1: i32) -> (i32, i32, i32) {
    %c0_i32 = arith.constant 0 : i32
    %c0_i32_0 = arith.constant 0 : i32
    return %arg0, %c0_i32, %arg1 : i32, i32, i32
  }
  func.func @transform_2(%arg0: i32, %arg1: i32) -> (i32, i32, i32) {
    %c0_i32 = arith.constant 0 : i32
    %c0_i32_0 = arith.constant 0 : i32
    return %arg0, %c0_i32, %arg1 : i32, i32, i32
  }
  func.func @transform_3(%arg0: i32, %arg1: i32) -> (i32, i32, i32) {
    %c0_i32 = arith.constant 0 : i32
    %c0_i32_0 = arith.constant 0 : i32
    %c0_i32_1 = arith.constant 0 : i32
    return %arg0, %c0_i32, %c0_i32_0 : i32, i32, i32
  }
}

</mosaic_0001>

<llo_original>
// kernel: tpu_custom_call.1
$region0: #{tpu_custom_call.1}
  #allocation0 [shape = 'u32[]', space=smem, size = 0x4, offset = 0x4, fixed_abs, tag = 'smem constant byte address 0x4 - core index']
  #allocation1 [shape = 'u32[144,128]{1,0:T(1,128)}', space=vmem, size = 0x12000, scoped, tag = 'internal scratch']
  #allocation2 [shape = 'f32[8,1]{1,0:T(8,128)}', space=vmem, size = 0x1000, scoped, tag = 'scratch operand']
  #allocation3 [shape = 'f32[8,1]{1,0:T(8,128)}', space=vmem, size = 0x1000, scoped, tag = 'scratch operand']
  %s0 = inlined_call_operand.hbm [shape: f32[8,32], index: 0, kind: input, shape index: {}]
  %s1 = inlined_call_operand.hbm [shape: f32[2,32,324], index: 1, kind: input, shape index: {}]
  %s2 = inlined_call_operand.hbm [shape: f32[2,32,324], index: 2, kind: input, shape index: {}]
  %s3 = inlined_call_operand.hbm [shape: f32[2,1,128], index: 3, kind: output, shape index: {}]
  %s4 = sld [smem:[#allocation0]]
  $region65: #{tpu_custom_call.1} parent=0
    _
  %s6 = ssub.s32 1, %s4
  %s7 = scalar_select 0, %s6, %s4
  $region1: #{tpu_custom_call.1} parent=0
    #allocation4 [shape = 'u8[4096]{0}', space=vmem, size = 0x1000, scoped, tag = 'input window, operand 0, single buffered']
    #allocation5 [shape = 's32[2]{0}', space=sflag, size = 0x8, scoped, tag = 'scoped memory for tpu_custom_call.1']
    #allocation6 [shape = 's32[2]{0}', space=sflag, size = 0x8, scoped, tag = 'scoped memory for tpu_custom_call.1']
    #allocation7 [shape = 'u8[32768]{0}', space=vmem, size = 0x8000, scoped, tag = 'input window, operand 1']
    #allocation8 [shape = 's32[2]{0}', space=sflag, size = 0x8, scoped, tag = 'scoped memory for tpu_custom_call.1']
    #allocation9 [shape = 'u8[32768]{0}', space=vmem, size = 0x8000, scoped, tag = 'input window, operand 2']
    #allocation10 [shape = 'u8[1024]{0}', space=vmem, size = 0x400, scoped, tag = 'output window, operand 0']
    %8 = vsyncpa [#allocation5], 0
    %9 = vsyncpa [#allocation8], 0
    %s10 = scalar_lea.sflag [#allocation8], 1
    %11 = vsyncpa %s10, 0
    %12 = vsyncpa [#allocation6], 0
    %s13 = scalar_lea.sflag [#allocation6], 1
    %14 = vsyncpa %s13, 0
    loop: start=0, step=1, limit=8
    $region2: #{tpu_custom_call.1} parent=1 // loop_pre_header
      _
    $region3: #{tpu_custom_call.1} parent=1 // loop_header
      %s16 = sphi 0, %s20
      %p17 = scmp.ge.s32.totalorder %s16, 8
      %s23 = sphi 0, %s35
      %s24 = sphi 0, %s31
      %s25 = sphi 0, %s23
      %s26 = sphi 0, %s24
      %s27 = sphi 0, %s25
      %s28 = sphi 0, %s26
      %s36 = sphi 0, %s36
      %s38 = sphi 0, %s36
      %s39 = sphi 0, %s38
      %s53 = sphi 0, %s39
      %s61 = sphi 0, %s63
      %s64 = sphi 0, %s61
      %s65 = sphi 0, %s64
      %s81 = sphi 0, %s65
      %s89 = sphi 0, %s91
      %s92 = sphi 0, %s89
      %s93 = sphi 0, %s92
      %s109 = sphi 0, %s93
      %s115 = sphi 0, %s117
      %s118 = sphi 0, %s115
      %s119 = sphi 0, %s118
      %s135 = sphi 0, %s119
    $region4: #{tpu_custom_call.1} parent=1 // loop_header_branch
      %19 = sbr.rel (%p17) target = $region8
    $region5: #{tpu_custom_call.1} parent=1 // loop_body
      %s21 = ssub.s32 %s16, 1
      %s22 = ssub.s32 %s16, 2
      %s29 = sadd.s32 1, %s24
      %p30 = scmp.ge.s32.totalorder %s29, 3
      %s31 = scalar_select %p30, 0, %s29
      %s32 = sadd.s32 1, %s23
      %s33 = scalar_select %p30, %s32, %s23
      %p34 = scmp.ge.s32.totalorder %s33, 2
      %s35 = scalar_select %p34, 0, %s33
      %s37 = sadd.s32 %s36, 1
      %p40 = scmp.eq.s32.totalorder %s16, 5
      %p41 = scmp.ne.s32.totalorder %s36, %s38
      %p42 = scmp.eq.s32.totalorder %s16, 0
      %p43 = por %p41, %p42
      %p44 = scmp.ne.s32.totalorder %s36, %s38
      %p45 = scmp.eq.s32.totalorder %s21, 5
      %p46 = por %p44, %p45
      %p47 = scmp.ne.s32.totalorder %s38, %s39
      %p48 = scmp.eq.s32.totalorder %s21, 0
      %p49 = por %p47, %p48
      %p50 = scmp.ne.s32.totalorder %s38, %s39
      %p51 = scmp.eq.s32.totalorder %s22, 5
      %p52 = por %p50, %p51
      %p54 = scmp.ne.s32.totalorder %s39, %s53
      %p55 = scmp.eq.s32.totalorder %s22, 0
      %p56 = por %p54, %p55
      %s57 = ssub.s32 %s23, %s35
      %s58 = ssub.s32 %s24, %s31
      %s59 = sor.u32 %s57, %s58
      %p60 = scmp.eq.s32.totalorder %s59, 0
      %s62 = sadd.s32 %s61, 1
      %s63 = scalar_select %p60, %s61, %s62
      %p66 = pneg %p60
      %p67 = scmp.eq.s32.totalorder %s16, 5
      %p68 = por %p66, %p67
      %p69 = scmp.ne.s32.totalorder %s61, %s64
      %p70 = scmp.eq.s32.totalorder %s16, 0
      %p71 = por %p69, %p70
      %p72 = scmp.ne.s32.totalorder %s61, %s64
      %p73 = scmp.eq.s32.totalorder %s21, 5
      %p74 = por %p72, %p73
      %p75 = scmp.ne.s32.totalorder %s64, %s65
      %p76 = scmp.eq.s32.totalorder %s21, 0
      %p77 = por %p75, %p76
      %p78 = scmp.ne.s32.totalorder %s64, %s65
      %p79 = scmp.eq.s32.totalorder %s22, 5
      %p80 = por %p78, %p79
      %p82 = scmp.ne.s32.totalorder %s65, %s81
      %p83 = scmp.eq.s32.totalorder %s22, 0
      %p84 = por %p82, %p83
      %s85 = ssub.s32 %s23, %s35
      %s86 = ssub.s32 %s24, %s31
      %s87 = sor.u32 %s85, %s86
      %p88 = scmp.eq.s32.totalorder %s87, 0
      %s90 = sadd.s32 %s89, 1
      %s91 = scalar_select %p88, %s89, %s90
      %p94 = pneg %p88
      %p95 = scmp.eq.s32.totalorder %s16, 5
      %p96 = por %p94, %p95
      %p97 = scmp.ne.s32.totalorder %s89, %s92
      %p98 = scmp.eq.s32.totalorder %s16, 0
      %p99 = por %p97, %p98
      %p100 = scmp.ne.s32.totalorder %s89, %s92
      %p101 = scmp.eq.s32.totalorder %s21, 5
      %p102 = por %p100, %p101
      %p103 = scmp.ne.s32.totalorder %s92, %s93
      %p104 = scmp.eq.s32.totalorder %s21, 0
      %p105 = por %p103, %p104
      %p106 = scmp.ne.s32.totalorder %s92, %s93
      %p107 = scmp.eq.s32.totalorder %s22, 5
      %p108 = por %p106, %p107
      %p110 = scmp.ne.s32.totalorder %s93, %s109
      %p111 = scmp.eq.s32.totalorder %s22, 0
      %p112 = por %p110, %p111
      %s113 = ssub.s32 %s23, %s35
      %p114 = scmp.eq.s32.totalorder %s113, 0
      %s116 = sadd.s32 %s115, 1
      %s117 = scalar_select %p114, %s115, %s116
      %p120 = pneg %p114
      %p121 = scmp.eq.s32.totalorder %s16, 5
      %p122 = por %p120, %p121
      %p123 = scmp.ne.s32.totalorder %s115, %s118
      %p124 = scmp.eq.s32.totalorder %s16, 0
      %p125 = por %p123, %p124
      %p126 = scmp.ne.s32.totalorder %s115, %s118
      %p127 = scmp.eq.s32.totalorder %s21, 5
      %p128 = por %p126, %p127
      %p129 = scmp.ne.s32.totalorder %s118, %s119
      %p130 = scmp.eq.s32.totalorder %s21, 0
      %p131 = por %p129, %p130
      %p132 = scmp.ne.s32.totalorder %s118, %s119
      %p133 = scmp.eq.s32.totalorder %s22, 5
      %p134 = por %p132, %p133
      %p136 = scmp.ne.s32.totalorder %s119, %s135
      %p137 = scmp.eq.s32.totalorder %s22, 0
      %p138 = por %p136, %p137
      %p139 = scmp.le.s32.totalorder 1, %s16
      %p140 = scmp.lt.s32.totalorder %s16, 7
      %p141 = pnand %p139, %p140
      %p142 = pneg %p141
      // Predicated region
      $region9: #{tpu_custom_call.1} parent=5 // pred_check
        _
      $region10: #{tpu_custom_call.1} parent=5 // pred_check_branch
        %144 = sbr.rel (%p141) target = $region12
      $region11: #{tpu_custom_call.1} parent=5 // pred_region
        %s145 = ssub.s32 %s16, 1
        // Predicated region
        $region13: #{tpu_custom_call.1} parent=11 // pred_check
          %p146 = pneg %p49
        $region14: #{tpu_custom_call.1} parent=11 // pred_check_branch
          %148 = sbr.rel (%p146) target = $region16
        $region15: #{tpu_custom_call.1} parent=11 // pred_region
          %s150 = ssub.s32 128, 128
          %151 = vsyncadd [#allocation5], %s150
          %s153 = sshll.u32 [#allocation4], 4
          %s154 = int_to_ptr.vmem [resolvable:$true] %s153
          %156 = dma.hbm_to_vmem [thread:$0]  %s0, 128, %s154, [#allocation5]
        $region16: #{tpu_custom_call.1} parent=11 // pred_fallthru
          _
      $region12: #{tpu_custom_call.1} parent=5 // pred_fallthru
        _
      %p157 = scmp.lt.s32.totalorder %s16, 6
      // Predicated region
      $region17: #{tpu_custom_call.1} parent=5 // pred_check
        %p158 = pneg %p157
      $region18: #{tpu_custom_call.1} parent=5 // pred_check_branch
        %160 = sbr.rel (%p158) target = $region20
      $region19: #{tpu_custom_call.1} parent=5 // pred_region
        // Predicated region
        $region21: #{tpu_custom_call.1} parent=19 // pred_check
          %p161 = pneg %p71
        $region22: #{tpu_custom_call.1} parent=19 // pred_check_branch
          %163 = sbr.rel (%p161) target = $region24
        $region23: #{tpu_custom_call.1} parent=19 // pred_region
          %s164 = sand.u32 %s16, 1
          %s165 = scalar_lea.sflag [#allocation8], %s164
          %s166 = sand.u32 %s61, 1
          %s167 = smul.addr %s166, 32
          %s168 = scalar_lea.vmem [#allocation7], %s167
          %s170 = ssub.s32 512, 512
          %171 = vsyncadd %s165, %s170
          %s172 = smul.addr %s23, 12
          %s173 = sadd.s32 %s24, %s172
          %s174 = smul.addr %s173, 128
          %s175 = scalar_lea.hbm %s1, %s174
          %s176 = sshll.u32 %s168, 4
          %s177 = int_to_ptr.vmem [resolvable:$true] %s176
          %182 = dma.hbm_to_vmem [thread:$0]  %s175, 512, %s177, %s165, 384, 128, 8
        $region24: #{tpu_custom_call.1} parent=19 // pred_fallthru
          _
        // Predicated region
        $region25: #{tpu_custom_call.1} parent=19 // pred_check
          %p183 = pneg %p99
        $region26: #{tpu_custom_call.1} parent=19 // pred_check_branch
          %185 = sbr.rel (%p183) target = $region28
        $region27: #{tpu_custom_call.1} parent=19 // pred_region
          %s186 = sand.u32 %s16, 1
          %s187 = scalar_lea.sflag [#allocation8], %s186
          %s188 = sand.u32 %s89, 1
          %s189 = smul.addr %s188, 32
          %s190 = scalar_lea.vmem [#allocation9], %s189
          %s192 = ssub.s32 512, 512
          %193 = vsyncadd %s187, %s192
          %s194 = smul.addr %s23, 12
          %s195 = sadd.s32 %s24, %s194
          %s196 = smul.addr %s195, 128
          %s197 = scalar_lea.hbm %s2, %s196
          %s198 = sshll.u32 %s190, 4
          %s199 = int_to_ptr.vmem [resolvable:$true] %s198
          %204 = dma.hbm_to_vmem [thread:$0]  %s197, 512, %s199, %s187, 384, 128, 8
        $region28: #{tpu_custom_call.1} parent=19 // pred_fallthru
          _
      $region20: #{tpu_custom_call.1} parent=5 // pred_fallthru
        _
      %p205 = scmp.le.s32.totalorder 1, %s16
      %p206 = scmp.lt.s32.totalorder %s16, 7
      %p207 = pnand %p205, %p206
      %p208 = pneg %p207
      // Predicated region
      $region29: #{tpu_custom_call.1} parent=5 // pred_check
        _
      $region30: #{tpu_custom_call.1} parent=5 // pred_check_branch
        %210 = sbr.rel (%p207) target = $region32
      $region31: #{tpu_custom_call.1} parent=5 // pred_region
        %s211 = ssub.s32 %s16, 1
        // Predicated region
        $region33: #{tpu_custom_call.1} parent=31 // pred_check
          %p212 = pneg %p49
        $region34: #{tpu_custom_call.1} parent=31 // pred_check_branch
          %214 = sbr.rel (%p212) target = $region36
        $region35: #{tpu_custom_call.1} parent=31 // pred_region
          %215 = dma.done [#allocation5], 128
        $region36: #{tpu_custom_call.1} parent=31 // pred_fallthru
          _
        %s216 = sand.u32 %s21, 1
        %s217 = scalar_lea.sflag [#allocation8], %s216
        %s218 = sand.u32 %s64, 1
        %s219 = smul.addr %s218, 32
        %s220 = scalar_lea.vmem [#allocation7], %s219
        // Predicated region
        $region37: #{tpu_custom_call.1} parent=31 // pred_check
          %p221 = pneg %p77
        $region38: #{tpu_custom_call.1} parent=31 // pred_check_branch
          %223 = sbr.rel (%p221) target = $region40
        $region39: #{tpu_custom_call.1} parent=31 // pred_region
          %224 = dma.done %s217, 512
        $region40: #{tpu_custom_call.1} parent=31 // pred_fallthru
          _
        %s225 = sand.u32 %s21, 1
        %s226 = scalar_lea.sflag [#allocation8], %s225
        %s227 = sand.u32 %s92, 1
        %s228 = smul.addr %s227, 32
        %s229 = scalar_lea.vmem [#allocation9], %s228
        // Predicated region
        $region41: #{tpu_custom_call.1} parent=31 // pred_check
          %p230 = pneg %p105
        $region42: #{tpu_custom_call.1} parent=31 // pred_check_branch
          %232 = sbr.rel (%p230) target = $region44
        $region43: #{tpu_custom_call.1} parent=31 // pred_region
          %233 = dma.done %s226, 512
        $region44: #{tpu_custom_call.1} parent=31 // pred_fallthru
          _
        %p234 = pneg %p49
        %p235 = pneg %p46
        %s236 = sand.u32 %s21, 1
        %s237 = scalar_lea.sflag [#allocation8], %s236
        %s238 = sand.u32 %s64, 1
        %s239 = smul.addr %s238, 32
        %s240 = scalar_lea.vmem [#allocation7], %s239
        %p241 = pneg %p77
        %p242 = pneg %p74
        %s243 = sand.u32 %s21, 1
        %s244 = scalar_lea.sflag [#allocation8], %s243
        %s245 = sand.u32 %s92, 1
        %s246 = smul.addr %s245, 32
        %s247 = scalar_lea.vmem [#allocation9], %s246
        %p248 = pneg %p105
        %p249 = pneg %p102
        %p250 = pneg %p131
        %p251 = pneg %p128
        %s252 = sand.u32 %s118, 1
        %s253 = scalar_lea.sflag [#allocation6], %s252
        %s254 = sand.u32 %s118, 1
        %s255 = scalar_lea.vmem [#allocation10], %s254
        %p256 = scmp.eq.s32.totalorder %s26, 0
        // Predicated region
        $region45: #{tpu_custom_call.1} parent=31 // pred_check
          %p257 = pneg %p256
        $region46: #{tpu_custom_call.1} parent=31 // pred_check_branch
          %259 = sbr.rel (%p257) target = $region48
        $region47: #{tpu_custom_call.1} parent=31 // pred_region
          %vm260 = vcmask 7168
          %261 = vst.msk [vmem:[#allocation2] sm:$0xff] %vm260, 0.0
          %262 = vst.msk [vmem:[#allocation3] sm:$0xff] %vm260, 0.0
        $region48: #{tpu_custom_call.1} parent=31 // pred_fallthru
          _
        %v263 = vld [vmem:[%s229] sm:$0xff]
        %v264 = vld [vmem:[%s229 + $0x8] sm:$0xff]
        %v265 = vld [vmem:[%s229 + $0x10] sm:$0xff]
        %v266 = vld [vmem:[%s229 + $0x18] sm:$0xff]
        %v267 = vld [vmem:[%s220] sm:$0xff]
        %v268 = vld [vmem:[%s220 + $0x8] sm:$0xff]
        %v269 = vld [vmem:[%s220 + $0x10] sm:$0xff]
        %v270 = vld [vmem:[%s220 + $0x18] sm:$0xff]
        %v271 = vld [vmem:[#allocation4] sm:$0xff]
        %vm272 = vcmask 261120
        %v274 = vsel %vm272, %v271, 0
        %276 = vmatprep.subr.mxu0 0.0
        %277 = vmatpush1.msra.mxu0 0.0
        %278 = vmatprep.subr.mxu0 0.0
        %279 = vmatpush1.msra.mxu0 0.0
        %280 = vmatprep.subr.mxu0 0.0
        %281 = vmatpush1.msra.mxu0 0.0
        %282 = vmatprep.subr.mxu0 0.0
        %283 = vmatpush1.msra.mxu0 0.0
        %284 = vmatprep.subr.mxu0 0.0
        %285 = vmatpush1.msra.mxu0 0.0
        %286 = vmatprep.subr.mxu0 0.0
        %287 = vmatpush1.msra.mxu0 0.0
        %288 = vmatprep.subr.mxu0 0.0
        %289 = vmatpush1.msra.mxu0 0.0
        %290 = vmatprep.subr.mxu0 0.0
        %291 = vmatpush1.msra.mxu0 0.0
        %292 = vmatprep.subr.mxu0 0.0
        %293 = vmatpush1.msra.mxu0 0.0
        %294 = vmatprep.subr.mxu0 0.0
        %295 = vmatpush1.msra.mxu0 0.0
        %296 = vmatprep.subr.mxu0 0.0
        %297 = vmatpush1.msra.mxu0 0.0
        %298 = vmatprep.subr.mxu0 0.0
        %299 = vmatpush1.msra.mxu0 0.0
        %300 = vmatprep.subr.mxu0 0.0
        %301 = vmatpush1.msra.mxu0 %v266
        %302 = vmatprep.subr.mxu0 0.0
        %303 = vmatpush1.msra.mxu0 %v265
        %304 = vmatprep.subr.mxu0 0.0
        %305 = vmatpush1.msra.mxu0 %v264
        %306 = vmatprep.subr.mxu0 0.0
        %307 = vmatpush1.msra.mxu0 %v263
        %308 = vmatprep.subr.mxu0 0.0
        %309 = vmatpush2.msra.mxu0 0.0
        %310 = vmatprep.subr.mxu0 0.0
        %311 = vmatpush2.msra.mxu0 0.0
        %312 = vmatprep.subr.mxu0 0.0
        %313 = vmatpush2.msra.mxu0 0.0
        %314 = vmatprep.subr.mxu0 0.0
        %315 = vmatpush2.msra.mxu0 0.0
        %316 = vmatprep.subr.mxu0 0.0
        %317 = vmatpush2.msra.mxu0 0.0
        %318 = vmatprep.subr.mxu0 0.0
        %319 = vmatpush2.msra.mxu0 0.0
        %320 = vmatprep.subr.mxu0 0.0
        %321 = vmatpush2.msra.mxu0 0.0
        %322 = vmatprep.subr.mxu0 0.0
        %323 = vmatpush2.msra.mxu0 0.0
        %324 = vmatprep.subr.mxu0 0.0
        %325 = vmatpush2.msra.mxu0 0.0
        %326 = vmatprep.subr.mxu0 0.0
        %327 = vmatpush2.msra.mxu0 0.0
        %328 = vmatprep.subr.mxu0 0.0
        %329 = vmatpush2.msra.mxu0 0.0
        %330 = vmatprep.subr.mxu0 0.0
        %331 = vmatpush2.msra.mxu0 0.0
        %332 = vmatprep.subr.mxu0 0.0
        %333 = vmatpush2.msra.mxu0 0.0
        %334 = vmatprep.subr.mxu0 0.0
        %335 = vmatpush2.msra.mxu0 0.0
        %336 = vmatprep.subr.mxu0 0.0
        %337 = vmatpush2.msra.mxu0 0.0
        %338 = vmatprep.subr.mxu0 0.0
        %339 = vmatpush2.msra.mxu0 0.0
        %340 = vmatprep.mubr.f32.mxu0 0.0
        %341 = vmatmul.mubr.f32.gmra.mxu0 %v274
        %v342 = vpop.f32.mrf.mxu0
        %v343 = vadd.f32 0.0, %v342
        %v344 = vpop.f32.mrf.mxu0
        %345 = vdwg.mxu0
        %v346 = vxor.u32 %v343, 2147483648
        %v347 = vmul.f32 %v346, 1.442695
        %v348 = vpow.pop %v347
        %v349 = vadd.f32 %v348, 1.0
        %v350 = vrcp.pop %v349
        %v351 = vmul.f32 1.0, %v350
        %v352 = vsub.f32 %v267, %v263
        %v353 = vsub.f32 %v268, %v264
        %v354 = vsub.f32 %v269, %v265
        %v355 = vsub.f32 %v270, %v266
        %v356 = vmul.f32 %v352, %v352
        %v357 = vmul.f32 %v353, %v353
        %v358 = vmul.f32 %v354, %v354
        %v359 = vmul.f32 %v355, %v355
        %v360 = vadd.f32 %v356, %v357
        %v361 = vadd.f32 %v360, %v358
        %v362 = vadd.f32 %v361, %v359
        %v363 = vrot.slane %v362, 4
        %v364 = vadd.f32 %v362, %v363
        %v365 = vrot.slane %v364, 2
        %v366 = vadd.f32 %v364, %v365
        %v367 = vrot.slane %v366, 1
        %v368 = vadd.f32 %v366, %v367
        %s369 = smul.u32 %s26, 128
        %v370 = vlaneseq
        %v371 = vand.u32 %v370, 127
        %v372 = vstv %s369
        %v373 = vadd.s32 %v372, %v371
        %vm374 = vcmp.lt.s32.totalorder %v373, 324
        %v375 = vsel %vm374, 1, 0
        %vm376 = vcmp.eq.s32.totalorder %v375, 1
        %v377 = vsel %vm376, %v351, 0.0
        %v378 = vsel %vm374, %v368, 0.0
        %v379 = vmul.f32 %v377, %v377
        %v380 = vld [vmem:[#allocation2] sm:$0xff]
        %v381 = vmul.f32 %v379, %v378
        %382 = vadd.xlane.f32.xlu0 %v381
        %v383 = vpop.xlane.xlu0 %382
        %v384 = vadd.f32 %v380, %v383
        %vm385 = vcmask 7168
        %386 = vst.msk [vmem:[#allocation2] sm:$0xff] %vm385, %v384
        %v387 = vld [vmem:[#allocation3] sm:$0xff]
        %388 = vadd.xlane.f32.xlu0 %v377
        %v389 = vpop.xlane.xlu0 %388
        %v390 = vadd.f32 %v387, %v389
        %391 = vst.msk [vmem:[#allocation3] sm:$0xff] %vm385, %v390
        %p392 = scmp.eq.s32.totalorder %s26, 2
        // Predicated region
        $region49: #{tpu_custom_call.1} parent=31 // pred_check
          %p393 = pneg %p392
        $region50: #{tpu_custom_call.1} parent=31 // pred_check_branch
          %395 = sbr.rel (%p393) target = $region52
        $region51: #{tpu_custom_call.1} parent=31 // pred_region
          %v396 = vld [vmem:[#allocation2] sm:$0xff]
          %v397 = vld [vmem:[#allocation3] sm:$0xff]
          %v398 = vadd.f32 %v397, 1e-05
          %v399 = vrcp.pop %v398
          %v400 = vmul.f32 %v396, %v399
          %v401 = vsel %vm385, %v400, 0.0
          %402 = vadd.xlane.f32.xlu0 %v401
          %v403 = vpop.xlane.xlu0 %402
          %v404 = vrot.slane %v403, 4
          %v405 = vadd.f32 %v403, %v404
          %v406 = vrot.slane %v405, 2
          %v407 = vadd.f32 %v405, %v406
          %v408 = vrot.slane %v407, 1
          %v409 = vadd.f32 %v407, %v408
          %s410 = vtos %v409
          %v411 = vstv %s410
          %412 = vst [vmem:[%s255] sm:$0x1] %v411
        $region52: #{tpu_custom_call.1} parent=31 // pred_fallthru
          _
        %s413 = sand.u32 %s118, 1
        %s414 = scalar_lea.sflag [#allocation6], %s413
        %s415 = sand.u32 %s118, 1
        %s416 = scalar_lea.vmem [#allocation10], %s415
        // Predicated region
        $region53: #{tpu_custom_call.1} parent=31 // pred_check
          %p417 = pneg %p128
        $region54: #{tpu_custom_call.1} parent=31 // pred_check_branch
          %419 = sbr.rel (%p417) target = $region56
        $region55: #{tpu_custom_call.1} parent=31 // pred_region
          %s421 = ssub.s32 16, 16
          %422 = vsyncadd %s414, %s421
          %s423 = smul.addr %s25, 16
          %s424 = scalar_lea.hbm %s3, %s423
          %s426 = sshll.u32 %s416, 4
          %s427 = int_to_ptr.vmem [resolvable:$true] %s426
          %429 = dma.vmem_to_hbm [thread:$0]  %s427, 16, %s424, %s414
        $region56: #{tpu_custom_call.1} parent=31 // pred_fallthru
          _
      $region32: #{tpu_custom_call.1} parent=5 // pred_fallthru
        _
      %p430 = scmp.le.s32.totalorder 2, %s16
      // Predicated region
      $region57: #{tpu_custom_call.1} parent=5 // pred_check
        %p431 = pneg %p430
      $region58: #{tpu_custom_call.1} parent=5 // pred_check_branch
        %433 = sbr.rel (%p431) target = $region60
      $region59: #{tpu_custom_call.1} parent=5 // pred_region
        %s434 = ssub.s32 %s16, 2
        // Predicated region
        $region61: #{tpu_custom_call.1} parent=59 // pred_check
          %p435 = pneg %p134
        $region62: #{tpu_custom_call.1} parent=59 // pred_check_branch
          %437 = sbr.rel (%p435) target = $region64
        $region63: #{tpu_custom_call.1} parent=59 // pred_region
          %s438 = sand.u32 %s119, 1
          %s439 = scalar_lea.sflag [#allocation6], %s438
          %s440 = sand.u32 %s119, 1
          %s441 = scalar_lea.vmem [#allocation10], %s440
          %442 = dma.done %s439, 16
        $region64: #{tpu_custom_call.1} parent=59 // pred_fallthru
          _
      $region60: #{tpu_custom_call.1} parent=5 // pred_fallthru
        _
    $region6: #{tpu_custom_call.1} parent=1 // loop_footer
      %s20 = sadd.s32 1, %s16
    $region7: #{tpu_custom_call.1} parent=1 // loop_footer_branch
      %15 = sbr.rel target = $region3
    $region8: #{tpu_custom_call.1} parent=1 // loop_exit
      _
    %443 = vsyncpa [#allocation5], 1
    %s444 = scalar_lea.sflag [#allocation5], 1
    %445 = vsyncpa %s444, 1
    %446 = vsyncpa [#allocation8], 1
    %s447 = scalar_lea.sflag [#allocation8], 1
    %448 = vsyncpa %s447, 1
    %449 = vsyncpa [#allocation6], 1
    %s450 = scalar_lea.sflag [#allocation6], 1
    %451 = vsyncpa %s450, 1

</llo_original>
